<compile_context>
chip_gen: v7x
topology: tpu7x:2x2x1
jax: 0.10.0
libtpu: 0.0.40
codegen_flags: <defaults>
</compile_context>

<pallas_src>
import jax
import jax.numpy as jnp
from jax.experimental import pallas as pl
from jax.experimental.pallas import tpu as pltpu

# ---- small synthetic GPT-2 config (stands in for the pretrained model) ----
VOCAB = 64          # vocab after "adding special tokens"
D_HIDDEN = 32       # hidden_dim (== model.config.hidden_size)
N_HEAD = 2
N_LAYER = 2
MAX_POS = 16
D_FF = 4 * D_HIDDEN
LN_EPS = 1e-5

LANE = 128                      # lane-dense padded hidden width
assert D_FF == LANE, "packing below assumes the FFN width equals one lane group"

# Row layout of the packed small-parameter stack: one (8, LANE) slab per layer
# plus one trailing slab for the final LayerNorm.
R_LN1G, R_LN1B, R_ATTB, R_LN2G, R_LN2B, R_FCB, R_PRB = range(7)
R_LNFG, R_LNFB = 0, 1


def gpt2_token0_kernel(x_ref, w_ref, s_ref, out_ref):
    """Full token-0 forward (all layers) in a single grid step.

    x_ref   : (Bp, LANE)           f32  token-0 embeddings, lanes >= D are zero
    w_ref   : (L, 3, LANE, LANE)   bf16 [0]=fused attn weight, [1]=fc_w, [2]=proj_w
    s_ref   : (L+1, 8, LANE)       f32  packed LN gains/biases and biases
    out_ref : (Bp, LANE)           f32  final-LN residual, lanes >= D are zero
    """
    lane = jax.lax.broadcasted_iota(jnp.int32, (1, LANE), 1)
    mask = (lane < D_HIDDEN).astype(jnp.float32)       # real-lane mask
    inv_d = 1.0 / D_HIDDEN

    def layernorm(x, g, b):
        # Padded lanes of x are zero by construction, so the lane sum equals the
        # sum over the true D lanes; stats divide by the true D and the diff is
        # masked so padded lanes contribute nothing to the variance.  g/b are
        # zero-padded, so the output's padded lanes stay exactly zero.
        mu = jnp.sum(x, axis=-1, keepdims=True) * inv_d
        diff = (x - mu) * mask
        var = jnp.sum(diff * diff, axis=-1, keepdims=True) * inv_d
        return diff * jax.lax.rsqrt(var + LN_EPS) * g + b

    def mxu(x, w):
        # MXU matmul: cast activations to the (bf16) weight dtype, accumulate f32.
        return jnp.dot(x.astype(w.dtype), w, preferred_element_type=jnp.float32)

    x = x_ref[...]                                      # (Bp, LANE) f32 residual

    # N_LAYER is tiny here, so a statically unrolled loop keeps the whole layer
    # sequence visible to the scheduler.  At real GPT-2 scale, switch back to a
    # layer grid axis streaming one layer's weights per step.
    for l in range(N_LAYER):
        # ---- attention block at position 0 ----
        # Causal mask => position 0 attends only to key 0, so the whole
        # attention block is exactly ln1(x) @ (v_w @ att_w) + (v_b @ att_w + att_b),
        # folded offline into w_ref[l, 0] / s_ref[l, R_ATTB].
        h = layernorm(x, s_ref[l, R_LN1G:R_LN1G + 1, :],
                      s_ref[l, R_LN1B:R_LN1B + 1, :])
        x = x + mxu(h, w_ref[l, 0]) + s_ref[l, R_ATTB:R_ATTB + 1, :]

        # ---- MLP block (gelu_new) ----
        h2 = layernorm(x, s_ref[l, R_LN2G:R_LN2G + 1, :],
                       s_ref[l, R_LN2B:R_LN2B + 1, :])
        hid = jax.nn.gelu(mxu(h2, w_ref[l, 1]) + s_ref[l, R_FCB:R_FCB + 1, :],
                          approximate=True)
        x = x + mxu(hid, w_ref[l, 2]) + s_ref[l, R_PRB:R_PRB + 1, :]

    # Final LayerNorm, single lane-dense store.
    out_ref[...] = layernorm(x, s_ref[N_LAYER, R_LNFG:R_LNFG + 1, :],
                             s_ref[N_LAYER, R_LNFB:R_LNFB + 1, :])


def gpt2_token0_semantic_vectors(token0_ids, embed_params, kparams):
    """last_hidden_state[:, 0, :] for each sequence, given its first token."""
    B = token0_ids.shape[0]
    Bp = ((B + 15) // 16) * 16                # 16-row multiples: bf16 sublane pack

    # Embedding lookup + positional embedding of position 0 (JAX glue; gather).
    x0 = embed_params['wte'][token0_ids] + embed_params['wpe'][0][None, :]
    x0 = jnp.pad(x0.astype(jnp.float32),
                 ((0, Bp - B), (0, LANE - D_HIDDEN)))   # lane-dense zero padding

    wbig, small = kparams['wbig'], kparams['small']

    out = pl.pallas_call(
        gpt2_token0_kernel,
        out_shape=jax.ShapeDtypeStruct((Bp, LANE), jnp.float32),
        grid=(1,),
        in_specs=[
            pl.BlockSpec((Bp, LANE), lambda i: (0, 0)),
            pl.BlockSpec(wbig.shape, lambda i: (0, 0, 0, 0)),   # resident weights
            pl.BlockSpec(small.shape, lambda i: (0, 0, 0)),     # resident LN/bias
        ],
        out_specs=pl.BlockSpec((Bp, LANE), lambda i: (0, 0)),
        compiler_params=pltpu.CompilerParams(
            dimension_semantics=("arbitrary",),
            vmem_limit_bytes=32 * 1024 * 1024,
        ),
    )(x0, wbig, small)
    return out[:B, :D_HIDDEN]


def init_params(key):
    """Deterministic synthetic GPT-2 parameters (init std 0.02, GPT-2 style)."""
    ks = jax.random.split(key, 8)
    std = 0.02
    return {
        'wte':   std * jax.random.normal(ks[0], (VOCAB, D_HIDDEN), jnp.float32),
        'wpe':   std * jax.random.normal(ks[1], (MAX_POS, D_HIDDEN), jnp.float32),
        'ln1_g': jnp.ones((N_LAYER, D_HIDDEN), jnp.float32),
        'ln1_b': jnp.zeros((N_LAYER, D_HIDDEN), jnp.float32),
        'qkv_w': std * jax.random.normal(ks[2], (N_LAYER, D_HIDDEN, 3 * D_HIDDEN), jnp.float32),
        'qkv_b': jnp.zeros((N_LAYER, 3 * D_HIDDEN), jnp.float32),
        'att_w': std * jax.random.normal(ks[3], (N_LAYER, D_HIDDEN, D_HIDDEN), jnp.float32),
        'att_b': jnp.zeros((N_LAYER, D_HIDDEN), jnp.float32),
        'ln2_g': jnp.ones((N_LAYER, D_HIDDEN), jnp.float32),
        'ln2_b': jnp.zeros((N_LAYER, D_HIDDEN), jnp.float32),
        'fc_w':  std * jax.random.normal(ks[4], (N_LAYER, D_HIDDEN, D_FF), jnp.float32),
        'fc_b':  jnp.zeros((N_LAYER, D_FF), jnp.float32),
        'pr_w':  std * jax.random.normal(ks[5], (N_LAYER, D_FF, D_HIDDEN), jnp.float32),
        'pr_b':  jnp.zeros((N_LAYER, D_HIDDEN), jnp.float32),
        'lnf_g': jnp.ones((D_HIDDEN,), jnp.float32),
        'lnf_b': jnp.zeros((D_HIDDEN,), jnp.float32),
    }


def prep_kernel_params(p):
    """Kernel-side parameter layout:
       * exact offline fold of the position-0 attention (V proj @ out proj),
       * lane-dense zero padding of the hidden dim to 128,
       * ONE bf16 stack of all big weights and ONE f32 stack of all small
         vectors (single DMA each)."""
    D, L = D_HIDDEN, N_LAYER

    # Only the V columns of QKV matter at position 0; fold the output projection.
    v_w = p['qkv_w'][:, :, 2 * D:3 * D]                          # (L, D, D)
    v_b = p['qkv_b'][:, 2 * D:3 * D]                             # (L, D)
    w_attn = jnp.einsum('lij,ljk->lik', v_w, p['att_w'])         # (L, D, D)
    b_attn = jnp.einsum('lj,ljk->lk', v_b, p['att_w']) + p['att_b']

    def pad_w(w):    # (L, a, b) -> (L, LANE, LANE), zero padded
        return jnp.pad(w, ((0, 0),
                           (0, LANE - w.shape[1]),
                           (0, LANE - w.shape[2])))

    def pad_v(v):    # (L, n) -> (L, LANE), zero padded
        return jnp.pad(v, ((0, 0), (0, LANE - v.shape[1])))

    # Big weights: (L, 3, LANE, LANE) bf16 -> one DMA, lane-dense MXU operands.
    wbig = jnp.stack([pad_w(w_attn), pad_w(p['fc_w']), pad_w(p['pr_w'])],
                     axis=1).astype(jnp.bfloat16)

    # Small params: (L+1, 8, LANE) f32 -> one DMA.
    small_l = jnp.stack([
        pad_v(p['ln1_g']), pad_v(p['ln1_b']), pad_v(b_attn),
        pad_v(p['ln2_g']), pad_v(p['ln2_b']), pad_v(p['fc_b']),
        pad_v(p['pr_b']), jnp.zeros((L, LANE), jnp.float32),
    ], axis=1)                                                   # (L, 8, LANE)
    small_f = jnp.zeros((1, 8, LANE), jnp.float32)
    small_f = small_f.at[0, R_LNFG, :D].set(p['lnf_g'])
    small_f = small_f.at[0, R_LNFB, :D].set(p['lnf_b'])
    small = jnp.concatenate([small_l, small_f], axis=0)          # (L+1, 8, LANE)

    return {'wbig': wbig, 'small': small}


class AgentBListenerPallas:
    """Pallas/JAX re-implementation of AgentBListener's forward semantics."""

    def __init__(self, hidden_dim, key):
        assert hidden_dim == D_HIDDEN, \
            "D_HIDDEN must match the model's hidden_size."
        self.params = init_params(key)
        self.kernel_params = prep_kernel_params(self.params)

    def forward(self, inputs_cn_ids, inputs_en_candidates_flat_ids,
                num_candidates):
        # embedding_before = wte.weight.clone().detach()
        embedding_before = self.params['wte']

        # Fuse the Chinese pass and the flattened-English-candidates pass into
        # a single kernel call: only token 0 of each sequence contributes to
        # last_hidden_state[:, 0, :] under the causal mask.
        n_cn = inputs_cn_ids.shape[0]
        tok0 = jnp.concatenate(
            [inputs_cn_ids[:, 0], inputs_en_candidates_flat_ids[:, 0]], axis=0)
        vecs = gpt2_token0_semantic_vectors(tok0, self.params,
                                            self.kernel_params)

        semantic_vector_B_from_A = vecs[:n_cn]
        flat_semantic_vectors = vecs[n_cn:]
        semantic_vectors_B_candidates = flat_semantic_vectors.reshape(
            -1, num_candidates, D_HIDDEN)

        return (semantic_vector_B_from_A,
                semantic_vectors_B_candidates,
                embedding_before)

    def get_embedding_after(self):
        return self.params['wte']


if __name__ == "__main__":
    key = jax.random.PRNGKey(0)
    k_model, k_cn, k_en = jax.random.split(key, 3)

    BATCH = 2
    SEQ = 8
    NUM_CANDIDATES = 2

    # Deterministic "tokenized" inputs (stand-ins for tokenizer output).
    inputs_cn_ids = jax.random.randint(k_cn, (BATCH, SEQ), 0, VOCAB,
                                       dtype=jnp.int32)
    inputs_en_flat_ids = jax.random.randint(
        k_en, (BATCH * NUM_CANDIDATES, SEQ), 0, VOCAB, dtype=jnp.int32)

    listener = AgentBListenerPallas(D_HIDDEN, k_model)
    sem_vec, sem_cands, emb_before = listener.forward(
        inputs_cn_ids, inputs_en_flat_ids, NUM_CANDIDATES)

    jax.block_until_ready((sem_vec, sem_cands, emb_before))

    assert sem_vec.shape == (BATCH, D_HIDDEN)
    assert sem_cands.shape == (BATCH, NUM_CANDIDATES, D_HIDDEN)
    assert emb_before.shape == (VOCAB, D_HIDDEN)
    assert bool(jnp.all(jnp.isfinite(sem_vec)))
    assert bool(jnp.all(jnp.isfinite(sem_cands)))

    print("KERNEL_OK")
</pallas_src>

<mosaic_0001>
module attributes {stable_mosaic.version = 11 : i64} {
  func.func @gpt2_token0_kernel(%arg0: i32, %arg1: memref<16x128xf32, #tpu.memory_space<vmem>>, %arg2: memref<2x3x128x128xbf16, #tpu.memory_space<vmem>>, %arg3: memref<3x8x128xf32, #tpu.memory_space<vmem>>, %arg4: memref<16x128xf32, #tpu.memory_space<vmem>>) attributes {dimension_semantics = [#tpu.dimension_semantics<arbitrary>], iteration_bounds = array<i64: 1>, scalar_prefetch = 0 : i64, scratch_operands = 0 : i64, tpu.core_type = #tpu.core_type<tc>, window_params = [{pipeline_mode = #tpu.pipeline_mode<synchronous>, transform_indices = @transform_0, window_bounds = array<i64: 16, 128>}, {pipeline_mode = #tpu.pipeline_mode<synchronous>, transform_indices = @transform_1, window_bounds = array<i64: 2, 3, 128, 128>}, {pipeline_mode = #tpu.pipeline_mode<synchronous>, transform_indices = @transform_2, window_bounds = array<i64: 3, 8, 128>}, {pipeline_mode = #tpu.pipeline_mode<synchronous>, transform_indices = @transform_3, window_bounds = array<i64: 16, 128>}]} {
    %0 = tpu.iota {dimensions = array<i32: 1>} : vector<1x128xi32>
    %c32_i32 = arith.constant 32 : i32
    %1 = vector.broadcast %c32_i32 : i32 to vector<1x128xi32>
    %2 = arith.cmpi slt, %0, %1 : vector<1x128xi32>
    %3 = arith.extui %2 : vector<1x128xi1> to vector<1x128xi32>
    %4 = arith.sitofp %3 : vector<1x128xi32> to vector<1x128xf32>
    %c0 = arith.constant 0 : index
    %c0_0 = arith.constant 0 : index
    %5 = vector.load %arg1[%c0, %c0_0] : memref<16x128xf32, #tpu.memory_space<vmem>>, vector<16x128xf32>
    %c0_1 = arith.constant 0 : index
    %c0_2 = arith.constant 0 : index
    %c0_3 = arith.constant 0 : index
    %6 = vector.load %arg3[%c0_1, %c0_2, %c0_3] : memref<3x8x128xf32, #tpu.memory_space<vmem>>, vector<1x1x128xf32>
    %7 = vector.shape_cast %6 : vector<1x1x128xf32> to vector<1x128xf32>
    %c0_4 = arith.constant 0 : index
    %c1 = arith.constant 1 : index
    %c0_5 = arith.constant 0 : index
    %8 = vector.load %arg3[%c0_4, %c1, %c0_5] : memref<3x8x128xf32, #tpu.memory_space<vmem>>, vector<1x1x128xf32>
    %9 = vector.shape_cast %8 : vector<1x1x128xf32> to vector<1x128xf32>
    %cst = arith.constant dense<0.000000e+00> : vector<16xf32>
    %10 = vector.multi_reduction <add>, %5, %cst [1] : vector<16x128xf32> to vector<16xf32>
    %11 = vector.shape_cast %10 : vector<16xf32> to vector<16x1xf32>
    %cst_6 = arith.constant 3.125000e-02 : f32
    %12 = vector.broadcast %cst_6 : f32 to vector<16x1xf32>
    %13 = arith.mulf %11, %12 : vector<16x1xf32>
    %14 = vector.broadcast %13 : vector<16x1xf32> to vector<16x128xf32>
    %15 = arith.subf %5, %14 : vector<16x128xf32>
    %16 = vector.broadcast %4 : vector<1x128xf32> to vector<16x128xf32>
    %17 = arith.mulf %15, %16 : vector<16x128xf32>
    %18 = arith.mulf %17, %17 : vector<16x128xf32>
    %cst_7 = arith.constant dense<0.000000e+00> : vector<16xf32>
    %19 = vector.multi_reduction <add>, %18, %cst_7 [1] : vector<16x128xf32> to vector<16xf32>
    %20 = vector.shape_cast %19 : vector<16xf32> to vector<16x1xf32>
    %cst_8 = arith.constant 3.125000e-02 : f32
    %21 = vector.broadcast %cst_8 : f32 to vector<16x1xf32>
    %22 = arith.mulf %20, %21 : vector<16x1xf32>
    %cst_9 = arith.constant 9.99999974E-6 : f32
    %23 = vector.broadcast %cst_9 : f32 to vector<16x1xf32>
    %24 = arith.addf %22, %23 : vector<16x1xf32>
    %25 = math.rsqrt %24 : vector<16x1xf32>
    %26 = vector.broadcast %25 : vector<16x1xf32> to vector<16x128xf32>
    %27 = arith.mulf %17, %26 : vector<16x128xf32>
    %28 = vector.broadcast %7 : vector<1x128xf32> to vector<16x128xf32>
    %29 = arith.mulf %27, %28 : vector<16x128xf32>
    %30 = vector.broadcast %9 : vector<1x128xf32> to vector<16x128xf32>
    %31 = arith.addf %29, %30 : vector<16x128xf32>
    %c0_10 = arith.constant 0 : index
    %c0_11 = arith.constant 0 : index
    %c0_12 = arith.constant 0 : index
    %c0_13 = arith.constant 0 : index
    %32 = vector.load %arg2[%c0_10, %c0_11, %c0_12, %c0_13] : memref<2x3x128x128xbf16, #tpu.memory_space<vmem>>, vector<1x1x128x128xbf16>
    %33 = vector.shape_cast %32 : vector<1x1x128x128xbf16> to vector<128x128xbf16>
    %34 = arith.truncf %31 : vector<16x128xf32> to vector<16x128xbf16>
    %cst_14 = arith.constant dense<0.000000e+00> : vector<16x128xf32>
    %35 = tpu.matmul %34, %33, %cst_14 {dimension_numbers = #tpu.dot_dimension_numbers<[1], [0], [0], [1], [0, 0, 1, 1], [], []>} : vector<16x128xbf16>, vector<128x128xbf16>, vector<16x128xf32> -> vector<16x128xf32>
    %36 = arith.addf %5, %35 : vector<16x128xf32>
    %c0_15 = arith.constant 0 : index
    %c2 = arith.constant 2 : index
    %c0_16 = arith.constant 0 : index
    %37 = vector.load %arg3[%c0_15, %c2, %c0_16] : memref<3x8x128xf32, #tpu.memory_space<vmem>>, vector<1x1x128xf32>
    %38 = vector.shape_cast %37 : vector<1x1x128xf32> to vector<1x128xf32>
    %39 = vector.broadcast %38 : vector<1x128xf32> to vector<16x128xf32>
    %40 = arith.addf %36, %39 : vector<16x128xf32>
    %c0_17 = arith.constant 0 : index
    %c3 = arith.constant 3 : index
    %c0_18 = arith.constant 0 : index
    %41 = vector.load %arg3[%c0_17, %c3, %c0_18] : memref<3x8x128xf32, #tpu.memory_space<vmem>>, vector<1x1x128xf32>
    %42 = vector.shape_cast %41 : vector<1x1x128xf32> to vector<1x128xf32>
    %c0_19 = arith.constant 0 : index
    %c4 = arith.constant 4 : index
    %c0_20 = arith.constant 0 : index
    %43 = vector.load %arg3[%c0_19, %c4, %c0_20] : memref<3x8x128xf32, #tpu.memory_space<vmem>>, vector<1x1x128xf32>
    %44 = vector.shape_cast %43 : vector<1x1x128xf32> to vector<1x128xf32>
    %cst_21 = arith.constant dense<0.000000e+00> : vector<16xf32>
    %45 = vector.multi_reduction <add>, %40, %cst_21 [1] : vector<16x128xf32> to vector<16xf32>
    %46 = vector.shape_cast %45 : vector<16xf32> to vector<16x1xf32>
    %cst_22 = arith.constant 3.125000e-02 : f32
    %47 = vector.broadcast %cst_22 : f32 to vector<16x1xf32>
    %48 = arith.mulf %46, %47 : vector<16x1xf32>
    %49 = vector.broadcast %48 : vector<16x1xf32> to vector<16x128xf32>
    %50 = arith.subf %40, %49 : vector<16x128xf32>
    %51 = vector.broadcast %4 : vector<1x128xf32> to vector<16x128xf32>
    %52 = arith.mulf %50, %51 : vector<16x128xf32>
    %53 = arith.mulf %52, %52 : vector<16x128xf32>
    %cst_23 = arith.constant dense<0.000000e+00> : vector<16xf32>
    %54 = vector.multi_reduction <add>, %53, %cst_23 [1] : vector<16x128xf32> to vector<16xf32>
    %55 = vector.shape_cast %54 : vector<16xf32> to vector<16x1xf32>
    %cst_24 = arith.constant 3.125000e-02 : f32
    %56 = vector.broadcast %cst_24 : f32 to vector<16x1xf32>
    %57 = arith.mulf %55, %56 : vector<16x1xf32>
    %cst_25 = arith.constant 9.99999974E-6 : f32
    %58 = vector.broadcast %cst_25 : f32 to vector<16x1xf32>
    %59 = arith.addf %57, %58 : vector<16x1xf32>
    %60 = math.rsqrt %59 : vector<16x1xf32>
    %61 = vector.broadcast %60 : vector<16x1xf32> to vector<16x128xf32>
    %62 = arith.mulf %52, %61 : vector<16x128xf32>
    %63 = vector.broadcast %42 : vector<1x128xf32> to vector<16x128xf32>
    %64 = arith.mulf %62, %63 : vector<16x128xf32>
    %65 = vector.broadcast %44 : vector<1x128xf32> to vector<16x128xf32>
    %66 = arith.addf %64, %65 : vector<16x128xf32>
    %c0_26 = arith.constant 0 : index
    %c1_27 = arith.constant 1 : index
    %c0_28 = arith.constant 0 : index
    %c0_29 = arith.constant 0 : index
    %67 = vector.load %arg2[%c0_26, %c1_27, %c0_28, %c0_29] : memref<2x3x128x128xbf16, #tpu.memory_space<vmem>>, vector<1x1x128x128xbf16>
    %68 = vector.shape_cast %67 : vector<1x1x128x128xbf16> to vector<128x128xbf16>
    %69 = arith.truncf %66 : vector<16x128xf32> to vector<16x128xbf16>
    %cst_30 = arith.constant dense<0.000000e+00> : vector<16x128xf32>
    %70 = tpu.matmul %69, %68, %cst_30 {dimension_numbers = #tpu.dot_dimension_numbers<[1], [0], [0], [1], [0, 0, 1, 1], [], []>} : vector<16x128xbf16>, vector<128x128xbf16>, vector<16x128xf32> -> vector<16x128xf32>
    %c0_31 = arith.constant 0 : index
    %c5 = arith.constant 5 : index
    %c0_32 = arith.constant 0 : index
    %71 = vector.load %arg3[%c0_31, %c5, %c0_32] : memref<3x8x128xf32, #tpu.memory_space<vmem>>, vector<1x1x128xf32>
    %72 = vector.shape_cast %71 : vector<1x1x128xf32> to vector<1x128xf32>
    %73 = vector.broadcast %72 : vector<1x128xf32> to vector<16x128xf32>
    %74 = arith.addf %70, %73 : vector<16x128xf32>
    %75 = arith.mulf %74, %74 : vector<16x128xf32>
    %76 = arith.mulf %74, %75 : vector<16x128xf32>
    %cst_33 = arith.constant 4.471500e-02 : f32
    %77 = vector.broadcast %cst_33 : f32 to vector<16x128xf32>
    %78 = arith.mulf %77, %76 : vector<16x128xf32>
    %79 = arith.addf %74, %78 : vector<16x128xf32>
    %cst_34 = arith.constant 0.797884583 : f32
    %80 = vector.broadcast %cst_34 : f32 to vector<16x128xf32>
    %81 = arith.mulf %80, %79 : vector<16x128xf32>
    %82 = math.tanh %81 : vector<16x128xf32>
    %cst_35 = arith.constant 1.000000e+00 : f32
    %83 = vector.broadcast %cst_35 : f32 to vector<16x128xf32>
    %84 = arith.addf %83, %82 : vector<16x128xf32>
    %cst_36 = arith.constant 5.000000e-01 : f32
    %85 = vector.broadcast %cst_36 : f32 to vector<16x128xf32>
    %86 = arith.mulf %85, %84 : vector<16x128xf32>
    %87 = arith.mulf %74, %86 : vector<16x128xf32>
    %c0_37 = arith.constant 0 : index
    %c2_38 = arith.constant 2 : index
    %c0_39 = arith.constant 0 : index
    %c0_40 = arith.constant 0 : index
    %88 = vector.load %arg2[%c0_37, %c2_38, %c0_39, %c0_40] : memref<2x3x128x128xbf16, #tpu.memory_space<vmem>>, vector<1x1x128x128xbf16>
    %89 = vector.shape_cast %88 : vector<1x1x128x128xbf16> to vector<128x128xbf16>
    %90 = arith.truncf %87 : vector<16x128xf32> to vector<16x128xbf16>
    %cst_41 = arith.constant dense<0.000000e+00> : vector<16x128xf32>
    %91 = tpu.matmul %90, %89, %cst_41 {dimension_numbers = #tpu.dot_dimension_numbers<[1], [0], [0], [1], [0, 0, 1, 1], [], []>} : vector<16x128xbf16>, vector<128x128xbf16>, vector<16x128xf32> -> vector<16x128xf32>
    %92 = arith.addf %40, %91 : vector<16x128xf32>
    %c0_42 = arith.constant 0 : index
    %c6 = arith.constant 6 : index
    %c0_43 = arith.constant 0 : index
    %93 = vector.load %arg3[%c0_42, %c6, %c0_43] : memref<3x8x128xf32, #tpu.memory_space<vmem>>, vector<1x1x128xf32>
    %94 = vector.shape_cast %93 : vector<1x1x128xf32> to vector<1x128xf32>
    %95 = vector.broadcast %94 : vector<1x128xf32> to vector<16x128xf32>
    %96 = arith.addf %92, %95 : vector<16x128xf32>
    %c1_44 = arith.constant 1 : index
    %c0_45 = arith.constant 0 : index
    %c0_46 = arith.constant 0 : index
    %97 = vector.load %arg3[%c1_44, %c0_45, %c0_46] : memref<3x8x128xf32, #tpu.memory_space<vmem>>, vector<1x1x128xf32>
    %98 = vector.shape_cast %97 : vector<1x1x128xf32> to vector<1x128xf32>
    %c1_47 = arith.constant 1 : index
    %c1_48 = arith.constant 1 : index
    %c0_49 = arith.constant 0 : index
    %99 = vector.load %arg3[%c1_47, %c1_48, %c0_49] : memref<3x8x128xf32, #tpu.memory_space<vmem>>, vector<1x1x128xf32>
    %100 = vector.shape_cast %99 : vector<1x1x128xf32> to vector<1x128xf32>
    %cst_50 = arith.constant dense<0.000000e+00> : vector<16xf32>
    %101 = vector.multi_reduction <add>, %96, %cst_50 [1] : vector<16x128xf32> to vector<16xf32>
    %102 = vector.shape_cast %101 : vector<16xf32> to vector<16x1xf32>
    %cst_51 = arith.constant 3.125000e-02 : f32
    %103 = vector.broadcast %cst_51 : f32 to vector<16x1xf32>
    %104 = arith.mulf %102, %103 : vector<16x1xf32>
    %105 = vector.broadcast %104 : vector<16x1xf32> to vector<16x128xf32>
    %106 = arith.subf %96, %105 : vector<16x128xf32>
    %107 = vector.broadcast %4 : vector<1x128xf32> to vector<16x128xf32>
    %108 = arith.mulf %106, %107 : vector<16x128xf32>
    %109 = arith.mulf %108, %108 : vector<16x128xf32>
    %cst_52 = arith.constant dense<0.000000e+00> : vector<16xf32>
    %110 = vector.multi_reduction <add>, %109, %cst_52 [1] : vector<16x128xf32> to vector<16xf32>
    %111 = vector.shape_cast %110 : vector<16xf32> to vector<16x1xf32>
    %cst_53 = arith.constant 3.125000e-02 : f32
    %112 = vector.broadcast %cst_53 : f32 to vector<16x1xf32>
    %113 = arith.mulf %111, %112 : vector<16x1xf32>
    %cst_54 = arith.constant 9.99999974E-6 : f32
    %114 = vector.broadcast %cst_54 : f32 to vector<16x1xf32>
    %115 = arith.addf %113, %114 : vector<16x1xf32>
    %116 = math.rsqrt %115 : vector<16x1xf32>
    %117 = vector.broadcast %116 : vector<16x1xf32> to vector<16x128xf32>
    %118 = arith.mulf %108, %117 : vector<16x128xf32>
    %119 = vector.broadcast %98 : vector<1x128xf32> to vector<16x128xf32>
    %120 = arith.mulf %118, %119 : vector<16x128xf32>
    %121 = vector.broadcast %100 : vector<1x128xf32> to vector<16x128xf32>
    %122 = arith.addf %120, %121 : vector<16x128xf32>
    %c1_55 = arith.constant 1 : index
    %c0_56 = arith.constant 0 : index
    %c0_57 = arith.constant 0 : index
    %c0_58 = arith.constant 0 : index
    %123 = vector.load %arg2[%c1_55, %c0_56, %c0_57, %c0_58] : memref<2x3x128x128xbf16, #tpu.memory_space<vmem>>, vector<1x1x128x128xbf16>
    %124 = vector.shape_cast %123 : vector<1x1x128x128xbf16> to vector<128x128xbf16>
    %125 = arith.truncf %122 : vector<16x128xf32> to vector<16x128xbf16>
    %cst_59 = arith.constant dense<0.000000e+00> : vector<16x128xf32>
    %126 = tpu.matmul %125, %124, %cst_59 {dimension_numbers = #tpu.dot_dimension_numbers<[1], [0], [0], [1], [0, 0, 1, 1], [], []>} : vector<16x128xbf16>, vector<128x128xbf16>, vector<16x128xf32> -> vector<16x128xf32>
    %127 = arith.addf %96, %126 : vector<16x128xf32>
    %c1_60 = arith.constant 1 : index
    %c2_61 = arith.constant 2 : index
    %c0_62 = arith.constant 0 : index
    %128 = vector.load %arg3[%c1_60, %c2_61, %c0_62] : memref<3x8x128xf32, #tpu.memory_space<vmem>>, vector<1x1x128xf32>
    %129 = vector.shape_cast %128 : vector<1x1x128xf32> to vector<1x128xf32>
    %130 = vector.broadcast %129 : vector<1x128xf32> to vector<16x128xf32>
    %131 = arith.addf %127, %130 : vector<16x128xf32>
    %c1_63 = arith.constant 1 : index
    %c3_64 = arith.constant 3 : index
    %c0_65 = arith.constant 0 : index
    %132 = vector.load %arg3[%c1_63, %c3_64, %c0_65] : memref<3x8x128xf32, #tpu.memory_space<vmem>>, vector<1x1x128xf32>
    %133 = vector.shape_cast %132 : vector<1x1x128xf32> to vector<1x128xf32>
    %c1_66 = arith.constant 1 : index
    %c4_67 = arith.constant 4 : index
    %c0_68 = arith.constant 0 : index
    %134 = vector.load %arg3[%c1_66, %c4_67, %c0_68] : memref<3x8x128xf32, #tpu.memory_space<vmem>>, vector<1x1x128xf32>
    %135 = vector.shape_cast %134 : vector<1x1x128xf32> to vector<1x128xf32>
    %cst_69 = arith.constant dense<0.000000e+00> : vector<16xf32>
    %136 = vector.multi_reduction <add>, %131, %cst_69 [1] : vector<16x128xf32> to vector<16xf32>
    %137 = vector.shape_cast %136 : vector<16xf32> to vector<16x1xf32>
    %cst_70 = arith.constant 3.125000e-02 : f32
    %138 = vector.broadcast %cst_70 : f32 to vector<16x1xf32>
    %139 = arith.mulf %137, %138 : vector<16x1xf32>
    %140 = vector.broadcast %139 : vector<16x1xf32> to vector<16x128xf32>
    %141 = arith.subf %131, %140 : vector<16x128xf32>
    %142 = vector.broadcast %4 : vector<1x128xf32> to vector<16x128xf32>
    %143 = arith.mulf %141, %142 : vector<16x128xf32>
    %144 = arith.mulf %143, %143 : vector<16x128xf32>
    %cst_71 = arith.constant dense<0.000000e+00> : vector<16xf32>
    %145 = vector.multi_reduction <add>, %144, %cst_71 [1] : vector<16x128xf32> to vector<16xf32>
    %146 = vector.shape_cast %145 : vector<16xf32> to vector<16x1xf32>
    %cst_72 = arith.constant 3.125000e-02 : f32
    %147 = vector.broadcast %cst_72 : f32 to vector<16x1xf32>
    %148 = arith.mulf %146, %147 : vector<16x1xf32>
    %cst_73 = arith.constant 9.99999974E-6 : f32
    %149 = vector.broadcast %cst_73 : f32 to vector<16x1xf32>
    %150 = arith.addf %148, %149 : vector<16x1xf32>
    %151 = math.rsqrt %150 : vector<16x1xf32>
    %152 = vector.broadcast %151 : vector<16x1xf32> to vector<16x128xf32>
    %153 = arith.mulf %143, %152 : vector<16x128xf32>
    %154 = vector.broadcast %133 : vector<1x128xf32> to vector<16x128xf32>
    %155 = arith.mulf %153, %154 : vector<16x128xf32>
    %156 = vector.broadcast %135 : vector<1x128xf32> to vector<16x128xf32>
    %157 = arith.addf %155, %156 : vector<16x128xf32>
    %c1_74 = arith.constant 1 : index
    %c1_75 = arith.constant 1 : index
    %c0_76 = arith.constant 0 : index
    %c0_77 = arith.constant 0 : index
    %158 = vector.load %arg2[%c1_74, %c1_75, %c0_76, %c0_77] : memref<2x3x128x128xbf16, #tpu.memory_space<vmem>>, vector<1x1x128x128xbf16>
    %159 = vector.shape_cast %158 : vector<1x1x128x128xbf16> to vector<128x128xbf16>
    %160 = arith.truncf %157 : vector<16x128xf32> to vector<16x128xbf16>
    %cst_78 = arith.constant dense<0.000000e+00> : vector<16x128xf32>
    %161 = tpu.matmul %160, %159, %cst_78 {dimension_numbers = #tpu.dot_dimension_numbers<[1], [0], [0], [1], [0, 0, 1, 1], [], []>} : vector<16x128xbf16>, vector<128x128xbf16>, vector<16x128xf32> -> vector<16x128xf32>
    %c1_79 = arith.constant 1 : index
    %c5_80 = arith.constant 5 : index
    %c0_81 = arith.constant 0 : index
    %162 = vector.load %arg3[%c1_79, %c5_80, %c0_81] : memref<3x8x128xf32, #tpu.memory_space<vmem>>, vector<1x1x128xf32>
    %163 = vector.shape_cast %162 : vector<1x1x128xf32> to vector<1x128xf32>
    %164 = vector.broadcast %163 : vector<1x128xf32> to vector<16x128xf32>
    %165 = arith.addf %161, %164 : vector<16x128xf32>
    %166 = arith.mulf %165, %165 : vector<16x128xf32>
    %167 = arith.mulf %165, %166 : vector<16x128xf32>
    %cst_82 = arith.constant 4.471500e-02 : f32
    %168 = vector.broadcast %cst_82 : f32 to vector<16x128xf32>
    %169 = arith.mulf %168, %167 : vector<16x128xf32>
    %170 = arith.addf %165, %169 : vector<16x128xf32>
    %cst_83 = arith.constant 0.797884583 : f32
    %171 = vector.broadcast %cst_83 : f32 to vector<16x128xf32>
    %172 = arith.mulf %171, %170 : vector<16x128xf32>
    %173 = math.tanh %172 : vector<16x128xf32>
    %cst_84 = arith.constant 1.000000e+00 : f32
    %174 = vector.broadcast %cst_84 : f32 to vector<16x128xf32>
    %175 = arith.addf %174, %173 : vector<16x128xf32>
    %cst_85 = arith.constant 5.000000e-01 : f32
    %176 = vector.broadcast %cst_85 : f32 to vector<16x128xf32>
    %177 = arith.mulf %176, %175 : vector<16x128xf32>
    %178 = arith.mulf %165, %177 : vector<16x128xf32>
    %c1_86 = arith.constant 1 : index
    %c2_87 = arith.constant 2 : index
    %c0_88 = arith.constant 0 : index
    %c0_89 = arith.constant 0 : index
    %179 = vector.load %arg2[%c1_86, %c2_87, %c0_88, %c0_89] : memref<2x3x128x128xbf16, #tpu.memory_space<vmem>>, vector<1x1x128x128xbf16>
    %180 = vector.shape_cast %179 : vector<1x1x128x128xbf16> to vector<128x128xbf16>
    %181 = arith.truncf %178 : vector<16x128xf32> to vector<16x128xbf16>
    %cst_90 = arith.constant dense<0.000000e+00> : vector<16x128xf32>
    %182 = tpu.matmul %181, %180, %cst_90 {dimension_numbers = #tpu.dot_dimension_numbers<[1], [0], [0], [1], [0, 0, 1, 1], [], []>} : vector<16x128xbf16>, vector<128x128xbf16>, vector<16x128xf32> -> vector<16x128xf32>
    %183 = arith.addf %131, %182 : vector<16x128xf32>
    %c1_91 = arith.constant 1 : index
    %c6_92 = arith.constant 6 : index
    %c0_93 = arith.constant 0 : index
    %184 = vector.load %arg3[%c1_91, %c6_92, %c0_93] : memref<3x8x128xf32, #tpu.memory_space<vmem>>, vector<1x1x128xf32>
    %185 = vector.shape_cast %184 : vector<1x1x128xf32> to vector<1x128xf32>
    %186 = vector.broadcast %185 : vector<1x128xf32> to vector<16x128xf32>
    %187 = arith.addf %183, %186 : vector<16x128xf32>
    %c2_94 = arith.constant 2 : index
    %c0_95 = arith.constant 0 : index
    %c0_96 = arith.constant 0 : index
    %188 = vector.load %arg3[%c2_94, %c0_95, %c0_96] : memref<3x8x128xf32, #tpu.memory_space<vmem>>, vector<1x1x128xf32>
    %189 = vector.shape_cast %188 : vector<1x1x128xf32> to vector<1x128xf32>
    %c2_97 = arith.constant 2 : index
    %c1_98 = arith.constant 1 : index
    %c0_99 = arith.constant 0 : index
    %190 = vector.load %arg3[%c2_97, %c1_98, %c0_99] : memref<3x8x128xf32, #tpu.memory_space<vmem>>, vector<1x1x128xf32>
    %191 = vector.shape_cast %190 : vector<1x1x128xf32> to vector<1x128xf32>
    %cst_100 = arith.constant dense<0.000000e+00> : vector<16xf32>
    %192 = vector.multi_reduction <add>, %187, %cst_100 [1] : vector<16x128xf32> to vector<16xf32>
    %193 = vector.shape_cast %192 : vector<16xf32> to vector<16x1xf32>
    %cst_101 = arith.constant 3.125000e-02 : f32
    %194 = vector.broadcast %cst_101 : f32 to vector<16x1xf32>
    %195 = arith.mulf %193, %194 : vector<16x1xf32>
    %196 = vector.broadcast %195 : vector<16x1xf32> to vector<16x128xf32>
    %197 = arith.subf %187, %196 : vector<16x128xf32>
    %198 = vector.broadcast %4 : vector<1x128xf32> to vector<16x128xf32>
    %199 = arith.mulf %197, %198 : vector<16x128xf32>
    %200 = arith.mulf %199, %199 : vector<16x128xf32>
    %cst_102 = arith.constant dense<0.000000e+00> : vector<16xf32>
    %201 = vector.multi_reduction <add>, %200, %cst_102 [1] : vector<16x128xf32> to vector<16xf32>
    %202 = vector.shape_cast %201 : vector<16xf32> to vector<16x1xf32>
    %cst_103 = arith.constant 3.125000e-02 : f32
    %203 = vector.broadcast %cst_103 : f32 to vector<16x1xf32>
    %204 = arith.mulf %202, %203 : vector<16x1xf32>
    %cst_104 = arith.constant 9.99999974E-6 : f32
    %205 = vector.broadcast %cst_104 : f32 to vector<16x1xf32>
    %206 = arith.addf %204, %205 : vector<16x1xf32>
    %207 = math.rsqrt %206 : vector<16x1xf32>
    %208 = vector.broadcast %207 : vector<16x1xf32> to vector<16x128xf32>
    %209 = arith.mulf %199, %208 : vector<16x128xf32>
    %210 = vector.broadcast %189 : vector<1x128xf32> to vector<16x128xf32>
    %211 = arith.mulf %209, %210 : vector<16x128xf32>
    %212 = vector.broadcast %191 : vector<1x128xf32> to vector<16x128xf32>
    %213 = arith.addf %211, %212 : vector<16x128xf32>
    %c0_105 = arith.constant 0 : index
    %c0_106 = arith.constant 0 : index
    %214 = vector.load %arg4[%c0_105, %c0_106] : memref<16x128xf32, #tpu.memory_space<vmem>>, vector<16x128xf32>
    tpu.vector_store %arg4[%c0_105, %c0_106], %213 {strides = array<i32>} : memref<16x128xf32, #tpu.memory_space<vmem>>, vector<16x128xf32>,
    return
  }
  func.func @transform_0(%arg0: i32) -> (i32, i32) {
    %c0_i32 = arith.constant 0 : i32
    %c0_i32_0 = arith.constant 0 : i32
    %c0_i32_1 = arith.constant 0 : i32
    return %c0_i32, %c0_i32_0 : i32, i32
  }
  func.func @transform_1(%arg0: i32) -> (i32, i32, i32, i32) {
    %c0_i32 = arith.constant 0 : i32
    %c0_i32_0 = arith.constant 0 : i32
    %c0_i32_1 = arith.constant 0 : i32
    %c0_i32_2 = arith.constant 0 : i32
    %c0_i32_3 = arith.constant 0 : i32
    return %c0_i32, %c0_i32_0, %c0_i32_1, %c0_i32_2 : i32, i32, i32, i32
  }
  func.func @transform_2(%arg0: i32) -> (i32, i32, i32) {
    %c0_i32 = arith.constant 0 : i32
    %c0_i32_0 = arith.constant 0 : i32
    %c0_i32_1 = arith.constant 0 : i32
    %c0_i32_2 = arith.constant 0 : i32
    return %c0_i32, %c0_i32_0, %c0_i32_1 : i32, i32, i32
  }
  func.func @transform_3(%arg0: i32) -> (i32, i32) {
    %c0_i32 = arith.constant 0 : i32
    %c0_i32_0 = arith.constant 0 : i32
    %c0_i32_1 = arith.constant 0 : i32
    return %c0_i32, %c0_i32_0 : i32, i32
  }
}

</mosaic_0001>

<llo_original>
// kernel: tpu_custom_call.1
$region0: #{tpu_custom_call.1}
  #allocation0 [shape = 'u32[]', space=smem, size = 0x4, offset = 0x4, fixed_abs, tag = 'smem constant byte address 0x4 - core index']
  #allocation1 [shape = 'u32[144,128]{1,0:T(1,128)}', space=vmem, size = 0x12000, scoped, tag = 'internal scratch']
  %s0 = inlined_call_operand.hbm [shape: f32[16,128], index: 0, kind: input, shape index: {}]
  %s1 = inlined_call_operand.hbm [shape: bf16[2,3,128,128], index: 1, kind: input, shape index: {}]
  %s2 = inlined_call_operand.hbm [shape: f32[3,8,128], index: 2, kind: input, shape index: {}]
  %s3 = inlined_call_operand.hbm [shape: f32[16,128], index: 3, kind: output, shape index: {}]
  %s4 = sld [smem:[#allocation0]]
  $region34: #{tpu_custom_call.1} parent=0
    _
  %s6 = ssub.s32 1, %s4
  %s7 = scalar_select 0, %s6, %s4
  $region1: #{tpu_custom_call.1} parent=0
    #allocation2 [shape = 'u8[8192]{0}', space=vmem, size = 0x2000, scoped, tag = 'input window, operand 0, single buffered']
    #allocation3 [shape = 's32[1]{0}', space=sflag, size = 0x4, scoped, tag = 'scoped memory for tpu_custom_call.1']
    #allocation4 [shape = 's32[1]{0}', space=sflag, size = 0x4, scoped, tag = 'scoped memory for tpu_custom_call.1']
    #allocation5 [shape = 'u8[196608]{0}', space=vmem, size = 0x30000, scoped, tag = 'input window, operand 1, single buffered']
    #allocation6 [shape = 's32[1]{0}', space=sflag, size = 0x4, scoped, tag = 'scoped memory for tpu_custom_call.1']
    #allocation7 [shape = 'u8[12288]{0}', space=vmem, size = 0x3000, scoped, tag = 'input window, operand 2, single buffered']
    #allocation8 [shape = 'u8[8192]{0}', space=vmem, size = 0x2000, scoped, tag = 'output window, operand 0, single buffered']
    %8 = vsyncpa [#allocation3], 0
    %9 = vsyncpa [#allocation6], 0
    %10 = vsyncpa [#allocation4], 0
    // Predicated region
    $region2: #{tpu_custom_call.1} parent=1 // pred_check
      _
    $region3: #{tpu_custom_call.1} parent=1 // pred_check_branch
      %12 = sbr.rel (0) target = $region5
    $region4: #{tpu_custom_call.1} parent=1 // pred_region
      %s14 = ssub.s32 256, 256
      %15 = vsyncadd [#allocation3], %s14
      %s16 = sshll.u32 [#allocation2], 4
      %s17 = int_to_ptr.vmem [resolvable:$true] %s16
      %22 = dma.hbm_to_vmem [thread:$0]  %s0, 256, %s17, [#allocation3], 128, 128, 8
    $region5: #{tpu_custom_call.1} parent=1 // pred_fallthru
      _
    // Predicated region
    $region6: #{tpu_custom_call.1} parent=1 // pred_check
      _
    $region7: #{tpu_custom_call.1} parent=1 // pred_check_branch
      %24 = sbr.rel (0) target = $region9
    $region8: #{tpu_custom_call.1} parent=1 // pred_region
      %s26 = ssub.s32 6144, 6144
      %27 = vsyncadd [#allocation6], %s26
      %s28 = sshll.u32 [#allocation5], 4
      %s29 = int_to_ptr.vmem [resolvable:$true] %s28
      %34 = dma.hbm_to_vmem [thread:$0]  %s1, 6144, %s29, [#allocation6], 64, 64, 4
    $region9: #{tpu_custom_call.1} parent=1 // pred_fallthru
      _
    // Predicated region
    $region10: #{tpu_custom_call.1} parent=1 // pred_check
      _
    $region11: #{tpu_custom_call.1} parent=1 // pred_check_branch
      %36 = sbr.rel (0) target = $region13
    $region12: #{tpu_custom_call.1} parent=1 // pred_region
      %s38 = ssub.s32 384, 384
      %39 = vsyncadd [#allocation6], %s38
      %s40 = sshll.u32 [#allocation7], 4
      %s41 = int_to_ptr.vmem [resolvable:$true] %s40
      %46 = dma.hbm_to_vmem [thread:$0]  %s2, 384, %s41, [#allocation6], 128, 128, 8
    $region13: #{tpu_custom_call.1} parent=1 // pred_fallthru
      _
    // Predicated region
    $region14: #{tpu_custom_call.1} parent=1 // pred_check
      _
    $region15: #{tpu_custom_call.1} parent=1 // pred_check_branch
      %48 = sbr.rel (0) target = $region17
    $region16: #{tpu_custom_call.1} parent=1 // pred_region
      %49 = dma.done [#allocation3], 256
    $region17: #{tpu_custom_call.1} parent=1 // pred_fallthru
      _
    // Predicated region
    $region18: #{tpu_custom_call.1} parent=1 // pred_check
      _
    $region19: #{tpu_custom_call.1} parent=1 // pred_check_branch
      %51 = sbr.rel (0) target = $region21
    $region20: #{tpu_custom_call.1} parent=1 // pred_region
      %52 = dma.done [#allocation6], 6144
    $region21: #{tpu_custom_call.1} parent=1 // pred_fallthru
      _
    // Predicated region
    $region22: #{tpu_custom_call.1} parent=1 // pred_check
      _
    $region23: #{tpu_custom_call.1} parent=1 // pred_check_branch
      %54 = sbr.rel (0) target = $region25
    $region24: #{tpu_custom_call.1} parent=1 // pred_region
      %55 = dma.done [#allocation6], 384
    $region25: #{tpu_custom_call.1} parent=1 // pred_fallthru
      _
    %v57 = vlaneseq
    %v58 = vand.u32 %v57, 127
    %vm59 = vcmp.lt.s32.totalorder %v58, 32
    %v60 = vsel %vm59, 1, 0
    %v61 = vcvt.s32.f32 %v60
    %v62 = vld [vmem:[#allocation2] sm:$0xff]
    %v63 = vld [vmem:[#allocation2 + $0x8] sm:$0xff]
    %v64 = vld [vmem:[#allocation7] sm:$0x1]
    %v65 = vld [vmem:[#allocation7 + $0x1] sm:$0x1]
    %66 = vadd.xlane.f32.xlu0 %v62
    %v67 = vpop.xlane.xlu0 %66
    %68 = vadd.xlane.f32.xlu0 %v63
    %v69 = vpop.xlane.xlu0 %68
    %v70 = vmul.f32 %v67, 0.03125
    %v71 = vmul.f32 %v69, 0.03125
    %v72 = vsub.f32 %v62, %v70
    %v73 = vsub.f32 %v63, %v71
    %v74 = vmul.f32 %v72, %v61
    %v75 = vmul.f32 %v73, %v61
    %v76 = vmul.f32 %v74, %v74
    %v77 = vmul.f32 %v75, %v75
    %78 = vadd.xlane.f32.xlu0 %v76
    %v79 = vpop.xlane.xlu0 %78
    %80 = vadd.xlane.f32.xlu0 %v77
    %v81 = vpop.xlane.xlu0 %80
    %v82 = vmul.f32 %v79, 0.03125
    %v83 = vmul.f32 %v81, 0.03125
    %v84 = vadd.f32 %v82, 1e-05
    %v85 = vadd.f32 %v83, 1e-05
    %v86 = vrsqrt.pop %v84
    %v87 = vrsqrt.pop %v85
    %v88 = vmul.f32 %v74, %v86
    %v89 = vmul.f32 %v75, %v87
    %v90 = vlaneseq
    %v91 = vshrl.u32 %v90, 7
    %v92 = vsub.s32 0, %v91
    %v93 = vrot.slane %v64, %v92
    %v94 = vmul.f32 %v88, %v93
    %v95 = vmul.f32 %v89, %v93
    %v96 = vlaneseq
    %v97 = vshrl.u32 %v96, 7
    %v98 = vsub.s32 0, %v97
    %v99 = vrot.slane %v65, %v98
    %v100 = vadd.f32 %v94, %v99
    %v101 = vadd.f32 %v95, %v99
    %v102 = vld [vmem:[#allocation5] sm:$0xf]
    %v103 = vld [vmem:[#allocation5 + $0x4] sm:$0xf]
    %v104 = vld [vmem:[#allocation5 + $0x8] sm:$0xf]
    %v105 = vld [vmem:[#allocation5 + $0xc] sm:$0xf]
    %v106 = vld [vmem:[#allocation5 + $0x10] sm:$0xf]
    %v107 = vld [vmem:[#allocation5 + $0x14] sm:$0xf]
    %v108 = vld [vmem:[#allocation5 + $0x18] sm:$0xf]
    %v109 = vld [vmem:[#allocation5 + $0x1c] sm:$0xf]
    %v110 = vld [vmem:[#allocation5 + $0x20] sm:$0xf]
    %v111 = vld [vmem:[#allocation5 + $0x24] sm:$0xf]
    %v112 = vld [vmem:[#allocation5 + $0x28] sm:$0xf]
    %v113 = vld [vmem:[#allocation5 + $0x2c] sm:$0xf]
    %v114 = vld [vmem:[#allocation5 + $0x30] sm:$0xf]
    %v115 = vld [vmem:[#allocation5 + $0x34] sm:$0xf]
    %v116 = vld [vmem:[#allocation5 + $0x38] sm:$0xf]
    %v117 = vld [vmem:[#allocation5 + $0x3c] sm:$0xf]
    %v118 = vpack.c.bf16 %v101, %v100
    %v135 = vunpack.c.l.b16 %v102
    %v136 = vunpack.c.l.b16 %v103
    %v137 = vunpack.c.l.b16 %v104
    %v138 = vunpack.c.l.b16 %v105
    %v139 = vunpack.c.l.b16 %v106
    %v140 = vunpack.c.l.b16 %v107
    %v141 = vunpack.c.l.b16 %v108
    %v142 = vunpack.c.l.b16 %v109
    %v143 = vunpack.c.l.b16 %v110
    %v144 = vunpack.c.l.b16 %v111
    %v145 = vunpack.c.l.b16 %v112
    %v146 = vunpack.c.l.b16 %v113
    %v147 = vunpack.c.l.b16 %v114
    %v148 = vunpack.c.l.b16 %v115
    %v149 = vunpack.c.l.b16 %v116
    %v150 = vunpack.c.l.b16 %v117
    %v151 = vpack.c.b16 %v136, %v135
    %v152 = vpack.c.b16 %v138, %v137
    %v153 = vpack.c.b16 %v140, %v139
    %v154 = vpack.c.b16 %v142, %v141
    %v155 = vpack.c.b16 %v144, %v143
    %v156 = vpack.c.b16 %v146, %v145
    %v157 = vpack.c.b16 %v148, %v147
    %v158 = vpack.c.b16 %v150, %v149
    %167 = vmatprep.subr.bf16.mxu0 0
    %168 = vmatpush1.bf16.msra.mxu0 %v151
    %169 = vmatprep.subr.bf16.mxu0 0
    %170 = vmatpush1.bf16.msra.mxu0 %v152
    %171 = vmatprep.subr.bf16.mxu0 0
    %172 = vmatpush1.bf16.msra.mxu0 %v153
    %173 = vmatprep.subr.bf16.mxu0 0
    %174 = vmatpush1.bf16.msra.mxu0 %v154
    %175 = vmatprep.subr.bf16.mxu0 0
    %176 = vmatpush1.bf16.msra.mxu0 %v155
    %177 = vmatprep.subr.bf16.mxu0 0
    %178 = vmatpush1.bf16.msra.mxu0 %v156
    %179 = vmatprep.subr.bf16.mxu0 0
    %180 = vmatpush1.bf16.msra.mxu0 %v157
    %181 = vmatprep.subr.bf16.mxu0 0
    %182 = vmatpush1.bf16.msra.mxu0 %v158
    %183 = vmatprep.subr.bf16.mxu0 0
    %184 = vmatpush1.bf16.msra.mxu0 0
    %185 = vmatprep.subr.bf16.mxu0 0
    %186 = vmatpush1.bf16.msra.mxu0 0
    %187 = vmatprep.subr.bf16.mxu0 0
    %188 = vmatpush1.bf16.msra.mxu0 0
    %189 = vmatprep.subr.bf16.mxu0 0
    %190 = vmatpush1.bf16.msra.mxu0 0
    %191 = vmatprep.subr.bf16.mxu0 0
    %192 = vmatpush1.bf16.msra.mxu0 0
    %193 = vmatprep.subr.bf16.mxu0 0
    %194 = vmatpush1.bf16.msra.mxu0 0
    %195 = vmatprep.subr.bf16.mxu0 0
    %196 = vmatpush1.bf16.msra.mxu0 0
    %197 = vmatprep.subr.bf16.mxu0 0
    %198 = vmatpush1.bf16.msra.mxu0 0
    %199 = vmatprep.mubr.bf16.mxu0 0
    %200 = vmatmul.mubr.bf16.gmra.mrb[0].mxu0 %v118
    %v201 = vpop.f32.mrb[0].mxu0
    %v202 = vadd.f32 0.0, %v201
    %v203 = vpop.f32.mrb[0].mxu0
    %v204 = vpop.f32.mrb[0].mxu0
    %v205 = vadd.f32 0.0, %v204
    %v206 = vpop.f32.mrb[0].mxu0
    %207 = vdwg.mxu0
    %v208 = vadd.f32 %v62, %v202
    %v209 = vadd.f32 %v63, %v205
    %v210 = vld [vmem:[#allocation7 + $0x2] sm:$0x1]
    %v211 = vlaneseq
    %v212 = vshrl.u32 %v211, 7
    %v213 = vsub.s32 0, %v212
    %v214 = vrot.slane %v210, %v213
    %v215 = vadd.f32 %v208, %v214
    %v216 = vadd.f32 %v209, %v214
    %v217 = vld [vmem:[#allocation7 + $0x3] sm:$0x1]
    %v218 = vld [vmem:[#allocation7 + $0x4] sm:$0x1]
    %219 = vadd.xlane.f32.xlu0 %v215
    %v220 = vpop.xlane.xlu0 %219
    %221 = vadd.xlane.f32.xlu0 %v216
    %v222 = vpop.xlane.xlu0 %221
    %v223 = vmul.f32 %v220, 0.03125
    %v224 = vmul.f32 %v222, 0.03125
    %v225 = vsub.f32 %v215, %v223
    %v226 = vsub.f32 %v216, %v224
    %v227 = vmul.f32 %v225, %v61
    %v228 = vmul.f32 %v226, %v61
    %v229 = vmul.f32 %v227, %v227
    %v230 = vmul.f32 %v228, %v228
    %231 = vadd.xlane.f32.xlu0 %v229
    %v232 = vpop.xlane.xlu0 %231
    %233 = vadd.xlane.f32.xlu0 %v230
    %v234 = vpop.xlane.xlu0 %233
    %v235 = vmul.f32 %v232, 0.03125
    %v236 = vmul.f32 %v234, 0.03125
    %v237 = vadd.f32 %v235, 1e-05
    %v238 = vadd.f32 %v236, 1e-05
    %v239 = vrsqrt.pop %v237
    %v240 = vrsqrt.pop %v238
    %v241 = vmul.f32 %v227, %v239
    %v242 = vmul.f32 %v228, %v240
    %v243 = vlaneseq
    %v244 = vshrl.u32 %v243, 7
    %v245 = vsub.s32 0, %v244
    %v246 = vrot.slane %v217, %v245
    %v247 = vmul.f32 %v241, %v246
    %v248 = vmul.f32 %v242, %v246
    %v249 = vlaneseq
    %v250 = vshrl.u32 %v249, 7
    %v251 = vsub.s32 0, %v250
    %v252 = vrot.slane %v218, %v251
    %v253 = vadd.f32 %v247, %v252
    %v254 = vadd.f32 %v248, %v252
    %s255 = scalar_lea.vmem [#allocation5], 64
    %v256 = vld [vmem:[%s255] sm:$0xf]
    %v257 = vld [vmem:[%s255 + $0x4] sm:$0xf]
    %v258 = vld [vmem:[%s255 + $0x8] sm:$0xf]
    %v259 = vld [vmem:[%s255 + $0xc] sm:$0xf]
    %v260 = vld [vmem:[%s255 + $0x10] sm:$0xf]
    %v261 = vld [vmem:[%s255 + $0x14] sm:$0xf]
    %v262 = vld [vmem:[%s255 + $0x18] sm:$0xf]
    %v263 = vld [vmem:[%s255 + $0x1c] sm:$0xf]
    %v264 = vld [vmem:[%s255 + $0x20] sm:$0xf]
    %v265 = vld [vmem:[%s255 + $0x24] sm:$0xf]
    %v266 = vld [vmem:[%s255 + $0x28] sm:$0xf]
    %v267 = vld [vmem:[%s255 + $0x2c] sm:$0xf]
    %v268 = vld [vmem:[%s255 + $0x30] sm:$0xf]
    %v269 = vld [vmem:[%s255 + $0x34] sm:$0xf]
    %v270 = vld [vmem:[%s255 + $0x38] sm:$0xf]
    %v271 = vld [vmem:[%s255 + $0x3c] sm:$0xf]
    %v272 = vpack.c.bf16 %v254, %v253
    %v273 = vld [vmem:[#allocation7 + $0x5] sm:$0x1]
    %v274 = vlaneseq
    %v275 = vshrl.u32 %v274, 7
    %v276 = vsub.s32 0, %v275
    %v277 = vrot.slane %v273, %v276
    %v294 = vunpack.c.l.b16 %v256
    %v295 = vunpack.c.l.b16 %v257
    %v296 = vunpack.c.l.b16 %v258
    %v297 = vunpack.c.l.b16 %v259
    %v298 = vunpack.c.l.b16 %v260
    %v299 = vunpack.c.l.b16 %v261
    %v300 = vunpack.c.l.b16 %v262
    %v301 = vunpack.c.l.b16 %v263
    %v302 = vunpack.c.l.b16 %v264
    %v303 = vunpack.c.l.b16 %v265
    %v304 = vunpack.c.l.b16 %v266
    %v305 = vunpack.c.l.b16 %v267
    %v306 = vunpack.c.l.b16 %v268
    %v307 = vunpack.c.l.b16 %v269
    %v308 = vunpack.c.l.b16 %v270
    %v309 = vunpack.c.l.b16 %v271
    %v310 = vpack.c.b16 %v295, %v294
    %v311 = vpack.c.b16 %v297, %v296
    %v312 = vpack.c.b16 %v299, %v298
    %v313 = vpack.c.b16 %v301, %v300
    %v314 = vpack.c.b16 %v303, %v302
    %v315 = vpack.c.b16 %v305, %v304
    %v316 = vpack.c.b16 %v307, %v306
    %v317 = vpack.c.b16 %v309, %v308
    %326 = vmatprep.subr.bf16.mxu0 0
    %327 = vmatpush1.bf16.msra.mxu0 %v310
    %328 = vmatprep.subr.bf16.mxu0 0
    %329 = vmatpush1.bf16.msra.mxu0 %v311
    %330 = vmatprep.subr.bf16.mxu0 0
    %331 = vmatpush1.bf16.msra.mxu0 %v312
    %332 = vmatprep.subr.bf16.mxu0 0
    %333 = vmatpush1.bf16.msra.mxu0 %v313
    %334 = vmatprep.subr.bf16.mxu0 0
    %335 = vmatpush1.bf16.msra.mxu0 %v314
    %336 = vmatprep.subr.bf16.mxu0 0
    %337 = vmatpush1.bf16.msra.mxu0 %v315
    %338 = vmatprep.subr.bf16.mxu0 0
    %339 = vmatpush1.bf16.msra.mxu0 %v316
    %340 = vmatprep.subr.bf16.mxu0 0
    %341 = vmatpush1.bf16.msra.mxu0 %v317
    %342 = vmatprep.subr.bf16.mxu0 0
    %343 = vmatpush1.bf16.msra.mxu0 0
    %344 = vmatprep.subr.bf16.mxu0 0
    %345 = vmatpush1.bf16.msra.mxu0 0
    %346 = vmatprep.subr.bf16.mxu0 0
    %347 = vmatpush1.bf16.msra.mxu0 0
    %348 = vmatprep.subr.bf16.mxu0 0
    %349 = vmatpush1.bf16.msra.mxu0 0
    %350 = vmatprep.subr.bf16.mxu0 0
    %351 = vmatpush1.bf16.msra.mxu0 0
    %352 = vmatprep.subr.bf16.mxu0 0
    %353 = vmatpush1.bf16.msra.mxu0 0
    %354 = vmatprep.subr.bf16.mxu0 0
    %355 = vmatpush1.bf16.msra.mxu0 0
    %356 = vmatprep.subr.bf16.mxu0 0
    %357 = vmatpush1.bf16.msra.mxu0 0
    %358 = vmatprep.mubr.bf16.mxu0 0
    %359 = vmatmul.mubr.bf16.gmra.mrb[0].mxu0 %v272
    %v360 = vpop.f32.mrb[0].mxu0
    %v361 = vadd.f32 %v277, %v360
    %v362 = vpop.f32.mrb[0].mxu0
    %v363 = vpop.f32.mrb[0].mxu0
    %v364 = vadd.f32 %v277, %v363
    %v365 = vpop.f32.mrb[0].mxu0
    %366 = vdwg.mxu0
    %v367 = vmul.f32 %v361, %v361
    %v368 = vmul.f32 %v364, %v364
    %v369 = vmul.f32 %v361, %v367
    %v370 = vmul.f32 %v364, %v368
    %v371 = vmul.f32 %v369, 0.044715
    %v372 = vmul.f32 %v370, 0.044715
    %v373 = vadd.f32 %v361, %v371
    %v374 = vadd.f32 %v364, %v372
    %v375 = vmul.f32 %v373, 0.7978846
    %v376 = vmul.f32 %v374, 0.7978846
    %v377 = vtanh.pop %v375
    %v378 = vtanh.pop %v376
    %v379 = vadd.f32 %v377, 1.0
    %v380 = vadd.f32 %v378, 1.0
    %v381 = vmul.f32 %v379, 0.5
    %v382 = vmul.f32 %v380, 0.5
    %v383 = vmul.f32 %v361, %v381
    %v384 = vmul.f32 %v364, %v382
    %s385 = scalar_lea.vmem [#allocation5], 128
    %v386 = vld [vmem:[%s385] sm:$0xf]
    %v387 = vld [vmem:[%s385 + $0x4] sm:$0xf]
    %v388 = vld [vmem:[%s385 + $0x8] sm:$0xf]
    %v389 = vld [vmem:[%s385 + $0xc] sm:$0xf]
    %v390 = vld [vmem:[%s385 + $0x10] sm:$0xf]
    %v391 = vld [vmem:[%s385 + $0x14] sm:$0xf]
    %v392 = vld [vmem:[%s385 + $0x18] sm:$0xf]
    %v393 = vld [vmem:[%s385 + $0x1c] sm:$0xf]
    %v394 = vld [vmem:[%s385 + $0x20] sm:$0xf]
    %v395 = vld [vmem:[%s385 + $0x24] sm:$0xf]
    %v396 = vld [vmem:[%s385 + $0x28] sm:$0xf]
    %v397 = vld [vmem:[%s385 + $0x2c] sm:$0xf]
    %v398 = vld [vmem:[%s385 + $0x30] sm:$0xf]
    %v399 = vld [vmem:[%s385 + $0x34] sm:$0xf]
    %v400 = vld [vmem:[%s385 + $0x38] sm:$0xf]
    %v401 = vld [vmem:[%s385 + $0x3c] sm:$0xf]
    %v402 = vpack.c.bf16 %v384, %v383
    %v419 = vunpack.c.l.b16 %v386
    %v420 = vunpack.c.l.b16 %v387
    %v421 = vunpack.c.l.b16 %v388
    %v422 = vunpack.c.l.b16 %v389
    %v423 = vunpack.c.l.b16 %v390
    %v424 = vunpack.c.l.b16 %v391
    %v425 = vunpack.c.l.b16 %v392
    %v426 = vunpack.c.l.b16 %v393
    %v427 = vunpack.c.l.b16 %v394
    %v428 = vunpack.c.l.b16 %v395
    %v429 = vunpack.c.l.b16 %v396
    %v430 = vunpack.c.l.b16 %v397
    %v431 = vunpack.c.l.b16 %v398
    %v432 = vunpack.c.l.b16 %v399
    %v433 = vunpack.c.l.b16 %v400
    %v434 = vunpack.c.l.b16 %v401
    %v435 = vpack.c.b16 %v420, %v419
    %v436 = vpack.c.b16 %v422, %v421
    %v437 = vpack.c.b16 %v424, %v423
    %v438 = vpack.c.b16 %v426, %v425
    %v439 = vpack.c.b16 %v428, %v427
    %v440 = vpack.c.b16 %v430, %v429
    %v441 = vpack.c.b16 %v432, %v431
    %v442 = vpack.c.b16 %v434, %v433
    %451 = vmatprep.subr.bf16.mxu0 0
    %452 = vmatpush1.bf16.msra.mxu0 %v435
    %453 = vmatprep.subr.bf16.mxu0 0
    %454 = vmatpush1.bf16.msra.mxu0 %v436
    %455 = vmatprep.subr.bf16.mxu0 0
    %456 = vmatpush1.bf16.msra.mxu0 %v437
    %457 = vmatprep.subr.bf16.mxu0 0
    %458 = vmatpush1.bf16.msra.mxu0 %v438
    %459 = vmatprep.subr.bf16.mxu0 0
    %460 = vmatpush1.bf16.msra.mxu0 %v439
    %461 = vmatprep.subr.bf16.mxu0 0
    %462 = vmatpush1.bf16.msra.mxu0 %v440
    %463 = vmatprep.subr.bf16.mxu0 0
    %464 = vmatpush1.bf16.msra.mxu0 %v441
    %465 = vmatprep.subr.bf16.mxu0 0
    %466 = vmatpush1.bf16.msra.mxu0 %v442
    %467 = vmatprep.subr.bf16.mxu0 0
    %468 = vmatpush1.bf16.msra.mxu0 0
    %469 = vmatprep.subr.bf16.mxu0 0
    %470 = vmatpush1.bf16.msra.mxu0 0
    %471 = vmatprep.subr.bf16.mxu0 0
    %472 = vmatpush1.bf16.msra.mxu0 0
    %473 = vmatprep.subr.bf16.mxu0 0
    %474 = vmatpush1.bf16.msra.mxu0 0
    %475 = vmatprep.subr.bf16.mxu0 0
    %476 = vmatpush1.bf16.msra.mxu0 0
    %477 = vmatprep.subr.bf16.mxu0 0
    %478 = vmatpush1.bf16.msra.mxu0 0
    %479 = vmatprep.subr.bf16.mxu0 0
    %480 = vmatpush1.bf16.msra.mxu0 0
    %481 = vmatprep.subr.bf16.mxu0 0
    %482 = vmatpush1.bf16.msra.mxu0 0
    %483 = vmatprep.mubr.bf16.mxu0 0
    %484 = vmatmul.mubr.bf16.gmra.mrb[0].mxu0 %v402
    %v485 = vpop.f32.mrb[0].mxu0
    %v486 = vadd.f32 0.0, %v485
    %v487 = vpop.f32.mrb[0].mxu0
    %v488 = vpop.f32.mrb[0].mxu0
    %v489 = vadd.f32 0.0, %v488
    %v490 = vpop.f32.mrb[0].mxu0
    %491 = vdwg.mxu0
    %v492 = vadd.f32 %v215, %v486
    %v493 = vadd.f32 %v216, %v489
    %v494 = vld [vmem:[#allocation7 + $0x6] sm:$0x1]
    %v495 = vlaneseq
    %v496 = vshrl.u32 %v495, 7
    %v497 = vsub.s32 0, %v496
    %v498 = vrot.slane %v494, %v497
    %v499 = vadd.f32 %v492, %v498
    %v500 = vadd.f32 %v493, %v498
    %s501 = scalar_lea.vmem [#allocation7], 8
    %v502 = vld [vmem:[%s501] sm:$0x1]
    %v503 = vld [vmem:[%s501 + $0x1] sm:$0x1]
    %504 = vadd.xlane.f32.xlu0 %v499
    %v505 = vpop.xlane.xlu0 %504
    %506 = vadd.xlane.f32.xlu0 %v500
    %v507 = vpop.xlane.xlu0 %506
    %v508 = vmul.f32 %v505, 0.03125
    %v509 = vmul.f32 %v507, 0.03125
    %v510 = vsub.f32 %v499, %v508
    %v511 = vsub.f32 %v500, %v509
    %v512 = vmul.f32 %v510, %v61
    %v513 = vmul.f32 %v511, %v61
    %v514 = vmul.f32 %v512, %v512
    %v515 = vmul.f32 %v513, %v513
    %516 = vadd.xlane.f32.xlu0 %v514
    %v517 = vpop.xlane.xlu0 %516
    %518 = vadd.xlane.f32.xlu0 %v515
    %v519 = vpop.xlane.xlu0 %518
    %v520 = vmul.f32 %v517, 0.03125
    %v521 = vmul.f32 %v519, 0.03125
    %v522 = vadd.f32 %v520, 1e-05
    %v523 = vadd.f32 %v521, 1e-05
    %v524 = vrsqrt.pop %v522
    %v525 = vrsqrt.pop %v523
    %v526 = vmul.f32 %v512, %v524
    %v527 = vmul.f32 %v513, %v525
    %v528 = vlaneseq
    %v529 = vshrl.u32 %v528, 7
    %v530 = vsub.s32 0, %v529
    %v531 = vrot.slane %v502, %v530
    %v532 = vmul.f32 %v526, %v531
    %v533 = vmul.f32 %v527, %v531
    %v534 = vlaneseq
    %v535 = vshrl.u32 %v534, 7
    %v536 = vsub.s32 0, %v535
    %v537 = vrot.slane %v503, %v536
    %v538 = vadd.f32 %v532, %v537
    %v539 = vadd.f32 %v533, %v537
    %s540 = scalar_lea.vmem [#allocation5], 192
    %v541 = vld [vmem:[%s540] sm:$0xf]
    %v542 = vld [vmem:[%s540 + $0x4] sm:$0xf]
    %v543 = vld [vmem:[%s540 + $0x8] sm:$0xf]
    %v544 = vld [vmem:[%s540 + $0xc] sm:$0xf]
    %v545 = vld [vmem:[%s540 + $0x10] sm:$0xf]
    %v546 = vld [vmem:[%s540 + $0x14] sm:$0xf]
    %v547 = vld [vmem:[%s540 + $0x18] sm:$0xf]
    %v548 = vld [vmem:[%s540 + $0x1c] sm:$0xf]
    %v549 = vld [vmem:[%s540 + $0x20] sm:$0xf]
    %v550 = vld [vmem:[%s540 + $0x24] sm:$0xf]
    %v551 = vld [vmem:[%s540 + $0x28] sm:$0xf]
    %v552 = vld [vmem:[%s540 + $0x2c] sm:$0xf]
    %v553 = vld [vmem:[%s540 + $0x30] sm:$0xf]
    %v554 = vld [vmem:[%s540 + $0x34] sm:$0xf]
    %v555 = vld [vmem:[%s540 + $0x38] sm:$0xf]
    %v556 = vld [vmem:[%s540 + $0x3c] sm:$0xf]
    %v557 = vpack.c.bf16 %v539, %v538
    %v574 = vunpack.c.l.b16 %v541
    %v575 = vunpack.c.l.b16 %v542
    %v576 = vunpack.c.l.b16 %v543
    %v577 = vunpack.c.l.b16 %v544
    %v578 = vunpack.c.l.b16 %v545
    %v579 = vunpack.c.l.b16 %v546
    %v580 = vunpack.c.l.b16 %v547
    %v581 = vunpack.c.l.b16 %v548
    %v582 = vunpack.c.l.b16 %v549
    %v583 = vunpack.c.l.b16 %v550
    %v584 = vunpack.c.l.b16 %v551
    %v585 = vunpack.c.l.b16 %v552
    %v586 = vunpack.c.l.b16 %v553
    %v587 = vunpack.c.l.b16 %v554
    %v588 = vunpack.c.l.b16 %v555
    %v589 = vunpack.c.l.b16 %v556
    %v590 = vpack.c.b16 %v575, %v574
    %v591 = vpack.c.b16 %v577, %v576
    %v592 = vpack.c.b16 %v579, %v578
    %v593 = vpack.c.b16 %v581, %v580
    %v594 = vpack.c.b16 %v583, %v582
    %v595 = vpack.c.b16 %v585, %v584
    %v596 = vpack.c.b16 %v587, %v586
    %v597 = vpack.c.b16 %v589, %v588
    %606 = vmatprep.subr.bf16.mxu0 0
    %607 = vmatpush1.bf16.msra.mxu0 %v590
    %608 = vmatprep.subr.bf16.mxu0 0
    %609 = vmatpush1.bf16.msra.mxu0 %v591
    %610 = vmatprep.subr.bf16.mxu0 0
    %611 = vmatpush1.bf16.msra.mxu0 %v592
    %612 = vmatprep.subr.bf16.mxu0 0
    %613 = vmatpush1.bf16.msra.mxu0 %v593
    %614 = vmatprep.subr.bf16.mxu0 0
    %615 = vmatpush1.bf16.msra.mxu0 %v594
    %616 = vmatprep.subr.bf16.mxu0 0
    %617 = vmatpush1.bf16.msra.mxu0 %v595
    %618 = vmatprep.subr.bf16.mxu0 0
    %619 = vmatpush1.bf16.msra.mxu0 %v596
    %620 = vmatprep.subr.bf16.mxu0 0
    %621 = vmatpush1.bf16.msra.mxu0 %v597
    %622 = vmatprep.subr.bf16.mxu0 0
    %623 = vmatpush1.bf16.msra.mxu0 0
    %624 = vmatprep.subr.bf16.mxu0 0
    %625 = vmatpush1.bf16.msra.mxu0 0
    %626 = vmatprep.subr.bf16.mxu0 0
    %627 = vmatpush1.bf16.msra.mxu0 0
    %628 = vmatprep.subr.bf16.mxu0 0
    %629 = vmatpush1.bf16.msra.mxu0 0
    %630 = vmatprep.subr.bf16.mxu0 0
    %631 = vmatpush1.bf16.msra.mxu0 0
    %632 = vmatprep.subr.bf16.mxu0 0
    %633 = vmatpush1.bf16.msra.mxu0 0
    %634 = vmatprep.subr.bf16.mxu0 0
    %635 = vmatpush1.bf16.msra.mxu0 0
    %636 = vmatprep.subr.bf16.mxu0 0
    %637 = vmatpush1.bf16.msra.mxu0 0
    %638 = vmatprep.mubr.bf16.mxu0 0
    %639 = vmatmul.mubr.bf16.gmra.mrb[0].mxu0 %v557
    %v640 = vpop.f32.mrb[0].mxu0
    %v641 = vadd.f32 0.0, %v640
    %v642 = vpop.f32.mrb[0].mxu0
    %v643 = vpop.f32.mrb[0].mxu0
    %v644 = vadd.f32 0.0, %v643
    %v645 = vpop.f32.mrb[0].mxu0
    %646 = vdwg.mxu0
    %v647 = vadd.f32 %v499, %v641
    %v648 = vadd.f32 %v500, %v644
    %v649 = vld [vmem:[%s501 + $0x2] sm:$0x1]
    %v650 = vlaneseq
    %v651 = vshrl.u32 %v650, 7
    %v652 = vsub.s32 0, %v651
    %v653 = vrot.slane %v649, %v652
    %v654 = vadd.f32 %v647, %v653
    %v655 = vadd.f32 %v648, %v653
    %v656 = vld [vmem:[%s501 + $0x3] sm:$0x1]
    %v657 = vld [vmem:[%s501 + $0x4] sm:$0x1]
    %658 = vadd.xlane.f32.xlu0 %v654
    %v659 = vpop.xlane.xlu0 %658
    %660 = vadd.xlane.f32.xlu0 %v655
    %v661 = vpop.xlane.xlu0 %660
    %v662 = vmul.f32 %v659, 0.03125
    %v663 = vmul.f32 %v661, 0.03125
    %v664 = vsub.f32 %v654, %v662
    %v665 = vsub.f32 %v655, %v663
    %v666 = vmul.f32 %v664, %v61
    %v667 = vmul.f32 %v665, %v61
    %v668 = vmul.f32 %v666, %v666
    %v669 = vmul.f32 %v667, %v667
    %670 = vadd.xlane.f32.xlu0 %v668
    %v671 = vpop.xlane.xlu0 %670
    %672 = vadd.xlane.f32.xlu0 %v669
    %v673 = vpop.xlane.xlu0 %672
    %v674 = vmul.f32 %v671, 0.03125
    %v675 = vmul.f32 %v673, 0.03125
    %v676 = vadd.f32 %v674, 1e-05
    %v677 = vadd.f32 %v675, 1e-05
    %v678 = vrsqrt.pop %v676
    %v679 = vrsqrt.pop %v677
    %v680 = vmul.f32 %v666, %v678
    %v681 = vmul.f32 %v667, %v679
    %v682 = vlaneseq
    %v683 = vshrl.u32 %v682, 7
    %v684 = vsub.s32 0, %v683
    %v685 = vrot.slane %v656, %v684
    %v686 = vmul.f32 %v680, %v685
    %v687 = vmul.f32 %v681, %v685
    %v688 = vlaneseq
    %v689 = vshrl.u32 %v688, 7
    %v690 = vsub.s32 0, %v689
    %v691 = vrot.slane %v657, %v690
    %v692 = vadd.f32 %v686, %v691
    %v693 = vadd.f32 %v687, %v691
    %s694 = scalar_lea.vmem [#allocation5], 256
    %v695 = vld [vmem:[%s694] sm:$0xf]
    %v696 = vld [vmem:[%s694 + $0x4] sm:$0xf]
    %v697 = vld [vmem:[%s694 + $0x8] sm:$0xf]
    %v698 = vld [vmem:[%s694 + $0xc] sm:$0xf]
    %v699 = vld [vmem:[%s694 + $0x10] sm:$0xf]
    %v700 = vld [vmem:[%s694 + $0x14] sm:$0xf]
    %v701 = vld [vmem:[%s694 + $0x18] sm:$0xf]
    %v702 = vld [vmem:[%s694 + $0x1c] sm:$0xf]
    %v703 = vld [vmem:[%s694 + $0x20] sm:$0xf]
    %v704 = vld [vmem:[%s694 + $0x24] sm:$0xf]
    %v705 = vld [vmem:[%s694 + $0x28] sm:$0xf]
    %v706 = vld [vmem:[%s694 + $0x2c] sm:$0xf]
    %v707 = vld [vmem:[%s694 + $0x30] sm:$0xf]
    %v708 = vld [vmem:[%s694 + $0x34] sm:$0xf]
    %v709 = vld [vmem:[%s694 + $0x38] sm:$0xf]
    %v710 = vld [vmem:[%s694 + $0x3c] sm:$0xf]
    %v711 = vpack.c.bf16 %v693, %v692
    %v712 = vld [vmem:[%s501 + $0x5] sm:$0x1]
    %v713 = vlaneseq
    %v714 = vshrl.u32 %v713, 7
    %v715 = vsub.s32 0, %v714
    %v716 = vrot.slane %v712, %v715
    %v733 = vunpack.c.l.b16 %v695
    %v734 = vunpack.c.l.b16 %v696
    %v735 = vunpack.c.l.b16 %v697
    %v736 = vunpack.c.l.b16 %v698
    %v737 = vunpack.c.l.b16 %v699
    %v738 = vunpack.c.l.b16 %v700
    %v739 = vunpack.c.l.b16 %v701
    %v740 = vunpack.c.l.b16 %v702
    %v741 = vunpack.c.l.b16 %v703
    %v742 = vunpack.c.l.b16 %v704
    %v743 = vunpack.c.l.b16 %v705
    %v744 = vunpack.c.l.b16 %v706
    %v745 = vunpack.c.l.b16 %v707
    %v746 = vunpack.c.l.b16 %v708
    %v747 = vunpack.c.l.b16 %v709
    %v748 = vunpack.c.l.b16 %v710
    %v749 = vpack.c.b16 %v734, %v733
    %v750 = vpack.c.b16 %v736, %v735
    %v751 = vpack.c.b16 %v738, %v737
    %v752 = vpack.c.b16 %v740, %v739
    %v753 = vpack.c.b16 %v742, %v741
    %v754 = vpack.c.b16 %v744, %v743
    %v755 = vpack.c.b16 %v746, %v745
    %v756 = vpack.c.b16 %v748, %v747
    %765 = vmatprep.subr.bf16.mxu0 0
    %766 = vmatpush1.bf16.msra.mxu0 %v749
    %767 = vmatprep.subr.bf16.mxu0 0
    %768 = vmatpush1.bf16.msra.mxu0 %v750
    %769 = vmatprep.subr.bf16.mxu0 0
    %770 = vmatpush1.bf16.msra.mxu0 %v751
    %771 = vmatprep.subr.bf16.mxu0 0
    %772 = vmatpush1.bf16.msra.mxu0 %v752
    %773 = vmatprep.subr.bf16.mxu0 0
    %774 = vmatpush1.bf16.msra.mxu0 %v753
    %775 = vmatprep.subr.bf16.mxu0 0
    %776 = vmatpush1.bf16.msra.mxu0 %v754
    %777 = vmatprep.subr.bf16.mxu0 0
    %778 = vmatpush1.bf16.msra.mxu0 %v755
    %779 = vmatprep.subr.bf16.mxu0 0
    %780 = vmatpush1.bf16.msra.mxu0 %v756
    %781 = vmatprep.subr.bf16.mxu0 0
    %782 = vmatpush1.bf16.msra.mxu0 0
    %783 = vmatprep.subr.bf16.mxu0 0
    %784 = vmatpush1.bf16.msra.mxu0 0
    %785 = vmatprep.subr.bf16.mxu0 0
    %786 = vmatpush1.bf16.msra.mxu0 0
    %787 = vmatprep.subr.bf16.mxu0 0
    %788 = vmatpush1.bf16.msra.mxu0 0
    %789 = vmatprep.subr.bf16.mxu0 0
    %790 = vmatpush1.bf16.msra.mxu0 0
    %791 = vmatprep.subr.bf16.mxu0 0
    %792 = vmatpush1.bf16.msra.mxu0 0
    %793 = vmatprep.subr.bf16.mxu0 0
    %794 = vmatpush1.bf16.msra.mxu0 0
    %795 = vmatprep.subr.bf16.mxu0 0
    %796 = vmatpush1.bf16.msra.mxu0 0
    %797 = vmatprep.mubr.bf16.mxu0 0
    %798 = vmatmul.mubr.bf16.gmra.mrb[0].mxu0 %v711
    %v799 = vpop.f32.mrb[0].mxu0
    %v800 = vadd.f32 %v716, %v799
    %v801 = vpop.f32.mrb[0].mxu0
    %v802 = vpop.f32.mrb[0].mxu0
    %v803 = vadd.f32 %v716, %v802
    %v804 = vpop.f32.mrb[0].mxu0
    %805 = vdwg.mxu0
    %v806 = vmul.f32 %v800, %v800
    %v807 = vmul.f32 %v803, %v803
    %v808 = vmul.f32 %v800, %v806
    %v809 = vmul.f32 %v803, %v807
    %v810 = vmul.f32 %v808, 0.044715
    %v811 = vmul.f32 %v809, 0.044715
    %v812 = vadd.f32 %v800, %v810
    %v813 = vadd.f32 %v803, %v811
    %v814 = vmul.f32 %v812, 0.7978846
    %v815 = vmul.f32 %v813, 0.7978846
    %v816 = vtanh.pop %v814
    %v817 = vtanh.pop %v815
    %v818 = vadd.f32 %v816, 1.0
    %v819 = vadd.f32 %v817, 1.0
    %v820 = vmul.f32 %v818, 0.5
    %v821 = vmul.f32 %v819, 0.5
    %v822 = vmul.f32 %v800, %v820
    %v823 = vmul.f32 %v803, %v821
    %s824 = scalar_lea.vmem [#allocation5], 320
    %v825 = vld [vmem:[%s824] sm:$0xf]
    %v826 = vld [vmem:[%s824 + $0x4] sm:$0xf]
    %v827 = vld [vmem:[%s824 + $0x8] sm:$0xf]
    %v828 = vld [vmem:[%s824 + $0xc] sm:$0xf]
    %v829 = vld [vmem:[%s824 + $0x10] sm:$0xf]
    %v830 = vld [vmem:[%s824 + $0x14] sm:$0xf]
    %v831 = vld [vmem:[%s824 + $0x18] sm:$0xf]
    %v832 = vld [vmem:[%s824 + $0x1c] sm:$0xf]
    %v833 = vld [vmem:[%s824 + $0x20] sm:$0xf]
    %v834 = vld [vmem:[%s824 + $0x24] sm:$0xf]
    %v835 = vld [vmem:[%s824 + $0x28] sm:$0xf]
    %v836 = vld [vmem:[%s824 + $0x2c] sm:$0xf]
    %v837 = vld [vmem:[%s824 + $0x30] sm:$0xf]
    %v838 = vld [vmem:[%s824 + $0x34] sm:$0xf]
    %v839 = vld [vmem:[%s824 + $0x38] sm:$0xf]
    %v840 = vld [vmem:[%s824 + $0x3c] sm:$0xf]
    %v841 = vpack.c.bf16 %v823, %v822
    %v858 = vunpack.c.l.b16 %v825
    %v859 = vunpack.c.l.b16 %v826
    %v860 = vunpack.c.l.b16 %v827
    %v861 = vunpack.c.l.b16 %v828
    %v862 = vunpack.c.l.b16 %v829
    %v863 = vunpack.c.l.b16 %v830
    %v864 = vunpack.c.l.b16 %v831
    %v865 = vunpack.c.l.b16 %v832
    %v866 = vunpack.c.l.b16 %v833
    %v867 = vunpack.c.l.b16 %v834
    %v868 = vunpack.c.l.b16 %v835
    %v869 = vunpack.c.l.b16 %v836
    %v870 = vunpack.c.l.b16 %v837
    %v871 = vunpack.c.l.b16 %v838
    %v872 = vunpack.c.l.b16 %v839
    %v873 = vunpack.c.l.b16 %v840
    %v874 = vpack.c.b16 %v859, %v858
    %v875 = vpack.c.b16 %v861, %v860
    %v876 = vpack.c.b16 %v863, %v862
    %v877 = vpack.c.b16 %v865, %v864
    %v878 = vpack.c.b16 %v867, %v866
    %v879 = vpack.c.b16 %v869, %v868
    %v880 = vpack.c.b16 %v871, %v870
    %v881 = vpack.c.b16 %v873, %v872
    %890 = vmatprep.subr.bf16.mxu0 0
    %891 = vmatpush1.bf16.msra.mxu0 %v874
    %892 = vmatprep.subr.bf16.mxu0 0
    %893 = vmatpush1.bf16.msra.mxu0 %v875
    %894 = vmatprep.subr.bf16.mxu0 0
    %895 = vmatpush1.bf16.msra.mxu0 %v876
    %896 = vmatprep.subr.bf16.mxu0 0
    %897 = vmatpush1.bf16.msra.mxu0 %v877
    %898 = vmatprep.subr.bf16.mxu0 0
    %899 = vmatpush1.bf16.msra.mxu0 %v878
    %900 = vmatprep.subr.bf16.mxu0 0
    %901 = vmatpush1.bf16.msra.mxu0 %v879
    %902 = vmatprep.subr.bf16.mxu0 0
    %903 = vmatpush1.bf16.msra.mxu0 %v880
    %904 = vmatprep.subr.bf16.mxu0 0
    %905 = vmatpush1.bf16.msra.mxu0 %v881
    %906 = vmatprep.subr.bf16.mxu0 0
    %907 = vmatpush1.bf16.msra.mxu0 0
    %908 = vmatprep.subr.bf16.mxu0 0
    %909 = vmatpush1.bf16.msra.mxu0 0
    %910 = vmatprep.subr.bf16.mxu0 0
    %911 = vmatpush1.bf16.msra.mxu0 0
    %912 = vmatprep.subr.bf16.mxu0 0
    %913 = vmatpush1.bf16.msra.mxu0 0
    %914 = vmatprep.subr.bf16.mxu0 0
    %915 = vmatpush1.bf16.msra.mxu0 0
    %916 = vmatprep.subr.bf16.mxu0 0
    %917 = vmatpush1.bf16.msra.mxu0 0
    %918 = vmatprep.subr.bf16.mxu0 0
    %919 = vmatpush1.bf16.msra.mxu0 0
    %920 = vmatprep.subr.bf16.mxu0 0
    %921 = vmatpush1.bf16.msra.mxu0 0
    %922 = vmatprep.mubr.bf16.mxu0 0
    %923 = vmatmul.mubr.bf16.gmra.mrb[0].mxu0 %v841
    %v924 = vpop.f32.mrb[0].mxu0
    %v925 = vadd.f32 0.0, %v924
    %v926 = vpop.f32.mrb[0].mxu0
    %v927 = vpop.f32.mrb[0].mxu0
    %v928 = vadd.f32 0.0, %v927
    %v929 = vpop.f32.mrb[0].mxu0
    %930 = vdwg.mxu0
    %v931 = vadd.f32 %v654, %v925
    %v932 = vadd.f32 %v655, %v928
    %v933 = vld [vmem:[%s501 + $0x6] sm:$0x1]
    %v934 = vlaneseq
    %v935 = vshrl.u32 %v934, 7
    %v936 = vsub.s32 0, %v935
    %v937 = vrot.slane %v933, %v936
    %v938 = vadd.f32 %v931, %v937
    %v939 = vadd.f32 %v932, %v937
    %s940 = scalar_lea.vmem [#allocation7], 16
    %v941 = vld [vmem:[%s940] sm:$0x1]
    %v942 = vld [vmem:[%s940 + $0x1] sm:$0x1]
    %943 = vadd.xlane.f32.xlu0 %v938
    %v944 = vpop.xlane.xlu0 %943
    %945 = vadd.xlane.f32.xlu0 %v939
    %v946 = vpop.xlane.xlu0 %945
    %v947 = vmul.f32 %v944, 0.03125
    %v948 = vmul.f32 %v946, 0.03125
    %v949 = vsub.f32 %v938, %v947
    %v950 = vsub.f32 %v939, %v948
    %v951 = vmul.f32 %v949, %v61
    %v952 = vmul.f32 %v950, %v61
    %v953 = vmul.f32 %v951, %v951
    %v954 = vmul.f32 %v952, %v952
    %955 = vadd.xlane.f32.xlu0 %v953
    %v956 = vpop.xlane.xlu0 %955
    %957 = vadd.xlane.f32.xlu0 %v954
    %v958 = vpop.xlane.xlu0 %957
    %v959 = vmul.f32 %v956, 0.03125
    %v960 = vmul.f32 %v958, 0.03125
    %v961 = vadd.f32 %v959, 1e-05
    %v962 = vadd.f32 %v960, 1e-05
    %v963 = vrsqrt.pop %v961
    %v964 = vrsqrt.pop %v962
    %v965 = vmul.f32 %v951, %v963
    %v966 = vmul.f32 %v952, %v964
    %v967 = vlaneseq
    %v968 = vshrl.u32 %v967, 7
    %v969 = vsub.s32 0, %v968
    %v970 = vrot.slane %v941, %v969
    %v971 = vmul.f32 %v965, %v970
    %v972 = vmul.f32 %v966, %v970
    %v973 = vlaneseq
    %v974 = vshrl.u32 %v973, 7
    %v975 = vsub.s32 0, %v974
    %v976 = vrot.slane %v942, %v975
    %v977 = vadd.f32 %v971, %v976
    %v978 = vadd.f32 %v972, %v976
    %979 = vst [vmem:[#allocation8] sm:$0xff] %v977
    %980 = vst [vmem:[#allocation8 + $0x8] sm:$0xff] %v978
    // Predicated region
    $region26: #{tpu_custom_call.1} parent=1 // pred_check
      _
    $region27: #{tpu_custom_call.1} parent=1 // pred_check_branch
      %982 = sbr.rel (0) target = $region29
    $region28: #{tpu_custom_call.1} parent=1 // pred_region
      %s984 = ssub.s32 256, 256
      %985 = vsyncadd [#allocation4], %s984
      %s986 = sshll.u32 [#allocation8], 4
      %s987 = int_to_ptr.vmem [resolvable:$true] %s986
      %992 = dma.vmem_to_hbm [thread:$0]  %s987, 256, %s3, [#allocation4], 128, 128, 8
    $region29: #{tpu_custom_call.1} parent=1 // pred_fallthru
      _
    // Predicated region
    $region30: #{tpu_custom_call.1} parent=1 // pred_check
      _
    $region31: #{tpu_custom_call.1} parent=1 // pred_check_branch
      %994 = sbr.rel (0) target = $region33
    $region32: #{tpu_custom_call.1} parent=1 // pred_region
      %995 = dma.done [#allocation4], 256
    $region33: #{tpu_custom_call.1} parent=1 // pred_fallthru
      _
    %996 = vsyncpa [#allocation3], 1
    %997 = vsyncpa [#allocation6], 1
    %998 = vsyncpa [#allocation4], 1

</llo_original>
